<compile_context>
chip_gen: v7x
topology: tpu7x:2x2x1
jax: 0.10.0
libtpu: 0.0.40
codegen_flags: <defaults>
</compile_context>

<pallas_src>
import numpy as np
import jax
import jax.numpy as jnp
from jax.experimental import pallas as pl
from jax.experimental.pallas import tpu as pltpu


# ----------------------------------------------------------------------------
# Static matrices (float64 offline, cast to f32) — these are the module's
# deterministic "buffers".
# ----------------------------------------------------------------------------
def freqt_matrix(in_order, out_order, alpha):
    """diffsptk FrequencyTransform matrix, transposed: shape (in_order+1, out_order+1)
    so that y = x @ A. Computed in float64."""
    beta = 1.0 - alpha * alpha
    L1 = in_order + 1
    L2 = out_order + 1
    A = np.zeros((L2, L1), dtype=np.float64)
    A[0, :] = alpha ** np.arange(L1)
    if 1 < L2 and 1 < L1:
        A[1, 1:] = A[0, : L1 - 1] * np.arange(1, L1) * beta
    for i in range(2, L2):
        i1 = i - 1
        for j in range(1, L1):
            j1 = j - 1
            A[i, j] = A[i1, j1] + alpha * (A[i, j1] - A[i1, j])
    return np.ascontiguousarray(A.T)  # float64, (in_order+1, out_order+1)


def cosine_matrix(length, n_fft):
    """C[m, n] = cos(2*pi*m*n / n_fft); X = c @ C gives Re(DFT_N(c)). Float64."""
    m = np.arange(length)[:, None].astype(np.float64)
    n = np.arange(n_fft)[None, :].astype(np.float64)
    return np.cos(2.0 * np.pi * m * n / n_fft)


def fused_pnorm_matrices(cep_order, alpha, ir_length):
    """Fused, half-spectrum matrices.

    Returns
      Dt : (Nh, M+1) f32 with Dt = (2 * A @ C_half)^T  so  Dt @ x^T == 2*X[0:Nh]
      w  : (1, Nh)   f32 real-DFT symmetry weights folded with 1/N:
           sum_{n=0..N-1} exp(2X[n]) / N == w @ exp(2*X[0:Nh])
    """
    N = ir_length
    Nh = N // 2 + 1 if N % 2 == 0 else (N + 1) // 2
    A = freqt_matrix(cep_order, N - 1, -alpha)                    # (M+1, N) f64
    m = np.arange(N)[:, None].astype(np.float64)
    n = np.arange(Nh)[None, :].astype(np.float64)
    C_half = np.cos(2.0 * np.pi * m * n / N)                      # (N, Nh)  f64
    D_half = 2.0 * (A @ C_half)                                   # (M+1, Nh) f64
    w = np.full((1, Nh), 2.0 / N, dtype=np.float64)
    w[0, 0] = 1.0 / N
    if N % 2 == 0:
        w[0, -1] = 1.0 / N
    return (np.ascontiguousarray(D_half.T).astype(np.float32),
            w.astype(np.float32))


# ----------------------------------------------------------------------------
# Kernel
# ----------------------------------------------------------------------------
def pnorm_kernel(x_ref, dt_ref, w_ref, o_ref):
    # x_ref : (M+1, TB)  cepstral coeffs on sublanes, frames (batch) on lanes.
    # dt_ref: (Nh, M+1)  fused (2 * freqt @ cos_half)^T, resident in VMEM.
    # w_ref : (1, Nh)    symmetry weights * 1/N.
    # o_ref : (M+2, TB)  power-normalized cepstrum (transposed).
    hi = jax.lax.Precision.HIGHEST
    x = x_ref[...]                                                   # (M+1, TB)
    # spec2 = 2 * Re(DFT_N(freqt(x)))[0..N/2], one small MXU matmul.
    spec2 = jnp.dot(dt_ref[...], x,
                    preferred_element_type=jnp.float32, precision=hi)  # (Nh, TB)
    # r0 = mean_n exp(2X[n]) via symmetry-weighted half sum, reduced on the MXU.
    # TODO(synk): for very wide input ranges a max-shifted log-sum-exp would be
    # more robust, but the reference module does not do that either.
    e = jnp.exp(spec2)                                               # (Nh, TB)  EUP
    r0 = jnp.dot(w_ref[...], e,
                 preferred_element_type=jnp.float32, precision=hi)   # (1, TB)
    P = jnp.log(r0)                                                  # (1, TB)
    # y^T = [P ; x0 - 0.5*P ; x1..xM] — lane-dense sublane stores, no lane shuffles.
    o_ref[0:1, :] = P
    o_ref[1:2, :] = x[0:1, :] - 0.5 * P
    o_ref[2:, :] = x[1:, :]


# ----------------------------------------------------------------------------
# Wrapper
# ----------------------------------------------------------------------------
def _pick_tile(B, max_tile=2048):
    """Lane-tile size + grid length. Lane dim is a multiple of 128 whenever the
    grid has >1 block, and we keep >=2 blocks for larger B (v7x has 2 TCs)."""
    if B <= 256:
        return B, 1                                  # single full-extent block
    half = -(-B // 2)
    tb = min(max_tile, -(-half // 128) * 128)
    return tb, -(-B // tb)


def mel_cepstrum_power_normalization(x, Dt, w, *, max_tile_b=2048):
    """x: (..., M+1) f32 -> (..., M+2) f32, using fused matrices Dt (Nh, M+1), w (1, Nh)."""
    M1 = x.shape[-1]
    Nh = Dt.shape[0]
    assert Dt.shape == (Nh, M1)
    assert w.shape == (1, Nh)

    lead = x.shape[:-1]
    B = int(np.prod(lead)) if lead else 1
    # Layout plumbing: batch on the lane axis. Hot callers can keep data in this
    # (M+1, B) layout to avoid the transpose round trip entirely.
    xt = x.reshape(B, M1).T                                          # (M+1, B)

    tile_b, nb = _pick_tile(B, max_tile_b)

    cost = pl.CostEstimate(
        flops=2 * B * M1 * Nh + 2 * B * Nh,
        transcendentals=B * (Nh + 1),
        bytes_accessed=4 * (B * M1 + B * (M1 + 1) + Nh * M1 + Nh),
    )

    out_t = pl.pallas_call(
        pnorm_kernel,
        out_shape=jax.ShapeDtypeStruct((M1 + 1, B), jnp.float32),
        grid_spec=pltpu.PrefetchScalarGridSpec(
            num_scalar_prefetch=0,
            grid=(nb,),
            in_specs=[
                pl.BlockSpec((M1, tile_b), lambda i: (0, i)),   # x^T tile (lane-dense)
                pl.BlockSpec((Nh, M1), lambda i: (0, 0)),       # fused matrix (resident)
                pl.BlockSpec((1, Nh), lambda i: (0, 0)),        # symmetry weights (resident)
            ],
            out_specs=pl.BlockSpec((M1 + 1, tile_b), lambda i: (0, i)),
        ),
        compiler_params=pltpu.CompilerParams(
            dimension_semantics=("parallel",)),
        cost_estimate=cost,
    )(xt, Dt, w)

    return out_t.T.reshape(*lead, M1 + 1)


# ----------------------------------------------------------------------------
# Independent pure-JAX reference (unfused matrices, full spectrum, f32).
# ----------------------------------------------------------------------------
def reference(x, cep_order, alpha, ir_length):
    A = jnp.asarray(freqt_matrix(cep_order, ir_length - 1, -alpha).astype(np.float32))
    C = jnp.asarray(cosine_matrix(ir_length, ir_length).astype(np.float32))
    c = jnp.einsum("...m,ml->...l", x, A, precision="highest")
    spec = jnp.einsum("...l,ln->...n", c, C, precision="highest")
    r0 = jnp.mean(jnp.exp(2.0 * spec), axis=-1, keepdims=True)
    P = jnp.log(r0)
    return jnp.concatenate([P, x[..., :1] - 0.5 * P, x[..., 1:]], axis=-1)


if __name__ == "__main__":
    cep_order = 7          # M
    alpha = 0.1
    ir_length = 128        # N

    Dt_np, w_np = fused_pnorm_matrices(cep_order, alpha, ir_length)
    Dt = jnp.asarray(Dt_np)          # (65, 8)
    w = jnp.asarray(w_np)            # (1, 65)

    key = jax.random.PRNGKey(0)
    k1, k2 = jax.random.split(key)

    # Small shape consistent with the module: (..., M+1).
    x = 0.2 * jax.random.normal(k1, (2, 8, cep_order + 1), dtype=jnp.float32)
    y = mel_cepstrum_power_normalization(x, Dt, w)
    jax.block_until_ready(y)
    assert y.shape == (2, 8, cep_order + 2)
    np.testing.assert_allclose(
        np.asarray(y), np.asarray(reference(x, cep_order, alpha, ir_length)),
        rtol=1e-4, atol=1e-4)

    # Slightly larger, non-multiple-of-128 batch: exercises the multi-block grid
    # with a ragged (masked) last block and the megacore-friendly tiling.
    xb = 0.2 * jax.random.normal(k2, (5, 60, cep_order + 1), dtype=jnp.float32)  # B = 300
    yb = mel_cepstrum_power_normalization(xb, Dt, w)
    jax.block_until_ready(yb)
    np.testing.assert_allclose(
        np.asarray(yb), np.asarray(reference(xb, cep_order, alpha, ir_length)),
        rtol=1e-4, atol=1e-4)

    print("KERNEL_OK")
</pallas_src>

<mosaic_0001>
module attributes {stable_mosaic.version = 11 : i64} {
  func.func @pnorm_kernel(%arg0: i32, %arg1: memref<8x16xf32, #tpu.memory_space<vmem>>, %arg2: memref<65x8xf32, #tpu.memory_space<vmem>>, %arg3: memref<1x65xf32, #tpu.memory_space<vmem>>, %arg4: memref<9x16xf32, #tpu.memory_space<vmem>>) attributes {dimension_semantics = [#tpu.dimension_semantics<parallel>], iteration_bounds = array<i64: 1>, scalar_prefetch = 0 : i64, scratch_operands = 0 : i64, tpu.core_type = #tpu.core_type<tc>, window_params = [{transform_indices = @transform_0, window_bounds = array<i64: 8, 16>}, {pipeline_mode = #tpu.pipeline_mode<synchronous>, transform_indices = @transform_1, window_bounds = array<i64: 65, 8>}, {pipeline_mode = #tpu.pipeline_mode<synchronous>, transform_indices = @transform_2, window_bounds = array<i64: 1, 65>}, {transform_indices = @transform_3, window_bounds = array<i64: 9, 16>}]} {
    %c0 = arith.constant 0 : index
    %c0_0 = arith.constant 0 : index
    %0 = vector.load %arg1[%c0, %c0_0] : memref<8x16xf32, #tpu.memory_space<vmem>>, vector<8x16xf32>
    %c0_1 = arith.constant 0 : index
    %c0_2 = arith.constant 0 : index
    %1 = vector.load %arg2[%c0_1, %c0_2] : memref<65x8xf32, #tpu.memory_space<vmem>>, vector<65x8xf32>
    %cst = arith.constant dense<0.000000e+00> : vector<65x16xf32>
    %2 = tpu.matmul %1, %0, %cst {dimension_numbers = #tpu.dot_dimension_numbers<[1], [0], [0], [1], [0, 0, 1, 1], [], []>, precision = #tpu.contract_precision<fp32>} : vector<65x8xf32>, vector<8x16xf32>, vector<65x16xf32> -> vector<65x16xf32>
    %3 = math.exp %2 : vector<65x16xf32>
    %c0_3 = arith.constant 0 : index
    %c0_4 = arith.constant 0 : index
    %4 = vector.load %arg3[%c0_3, %c0_4] : memref<1x65xf32, #tpu.memory_space<vmem>>, vector<1x65xf32>
    %cst_5 = arith.constant dense<0.000000e+00> : vector<1x16xf32>
    %5 = tpu.matmul %4, %3, %cst_5 {dimension_numbers = #tpu.dot_dimension_numbers<[1], [0], [0], [1], [0, 0, 1, 1], [], []>, precision = #tpu.contract_precision<fp32>} : vector<1x65xf32>, vector<65x16xf32>, vector<1x16xf32> -> vector<1x16xf32>
    %6 = math.log %5 : vector<1x16xf32>
    %c0_6 = arith.constant 0 : index
    %c0_7 = arith.constant 0 : index
    %7 = vector.load %arg4[%c0_6, %c0_7] : memref<9x16xf32, #tpu.memory_space<vmem>>, vector<1x16xf32>
    tpu.vector_store %arg4[%c0_6, %c0_7], %6 {strides = array<i32>} : memref<9x16xf32, #tpu.memory_space<vmem>>, vector<1x16xf32>,
    %8 = vector.extract_strided_slice %0 {offsets = [0, 0], sizes = [1, 16], strides = [1, 1]} : vector<8x16xf32> to vector<1x16xf32>
    %cst_8 = arith.constant 5.000000e-01 : f32
    %9 = vector.broadcast %cst_8 : f32 to vector<1x16xf32>
    %10 = arith.mulf %9, %6 : vector<1x16xf32>
    %11 = arith.subf %8, %10 : vector<1x16xf32>
    %c1 = arith.constant 1 : index
    %c0_9 = arith.constant 0 : index
    %12 = vector.load %arg4[%c1, %c0_9] : memref<9x16xf32, #tpu.memory_space<vmem>>, vector<1x16xf32>
    tpu.vector_store %arg4[%c1, %c0_9], %11 {strides = array<i32>} : memref<9x16xf32, #tpu.memory_space<vmem>>, vector<1x16xf32>,
    %13 = vector.extract_strided_slice %0 {offsets = [1, 0], sizes = [7, 16], strides = [1, 1]} : vector<8x16xf32> to vector<7x16xf32>
    %c2 = arith.constant 2 : index
    %c0_10 = arith.constant 0 : index
    %14 = vector.load %arg4[%c2, %c0_10] : memref<9x16xf32, #tpu.memory_space<vmem>>, vector<7x16xf32>
    tpu.vector_store %arg4[%c2, %c0_10], %13 {strides = array<i32>} : memref<9x16xf32, #tpu.memory_space<vmem>>, vector<7x16xf32>,
    return
  }
  func.func @transform_0(%arg0: i32) -> (i32, i32) {
    %c0_i32 = arith.constant 0 : i32
    %c0_i32_0 = arith.constant 0 : i32
    return %c0_i32, %arg0 : i32, i32
  }
  func.func @transform_1(%arg0: i32) -> (i32, i32) {
    %c0_i32 = arith.constant 0 : i32
    %c0_i32_0 = arith.constant 0 : i32
    %c0_i32_1 = arith.constant 0 : i32
    return %c0_i32, %c0_i32_0 : i32, i32
  }
  func.func @transform_2(%arg0: i32) -> (i32, i32) {
    %c0_i32 = arith.constant 0 : i32
    %c0_i32_0 = arith.constant 0 : i32
    %c0_i32_1 = arith.constant 0 : i32
    return %c0_i32, %c0_i32_0 : i32, i32
  }
  func.func @transform_3(%arg0: i32) -> (i32, i32) {
    %c0_i32 = arith.constant 0 : i32
    %c0_i32_0 = arith.constant 0 : i32
    return %c0_i32, %arg0 : i32, i32
  }
}

</mosaic_0001>

<llo_original>
// kernel: tpu_custom_call.1
$region0: #{tpu_custom_call.1}
  #allocation0 [shape = 'u32[]', space=smem, size = 0x4, offset = 0x4, fixed_abs, tag = 'smem constant byte address 0x4 - core index']
  #allocation1 [shape = 'u32[144,128]{1,0:T(1,128)}', space=vmem, size = 0x12000, scoped, tag = 'internal scratch']
  %s0 = inlined_call_operand.vmem [shape: f32[8,16], index: 0, kind: input, shape index: {}]
  %s1 = inlined_call_operand.vmem [shape: f32[65,8], index: 1, kind: input, shape index: {}]
  %s2 = inlined_call_operand.vmem [shape: f32[1,65], index: 2, kind: input, shape index: {}]
  %s3 = inlined_call_operand.hbm [shape: f32[9,16], index: 3, kind: output, shape index: {}]
  %s4 = sld [smem:[#allocation0]]
  $region22: #{tpu_custom_call.1} parent=0
    _
  %s6 = ssub.s32 1, %s4
  %s7 = scalar_select 0, %s6, %s4
  $region1: #{tpu_custom_call.1} parent=0
    #allocation2 [shape = 'u8[8192]{0}', space=vmem, size = 0x2000, scoped, tag = 'output window, operand 0, single buffered']
    #allocation3 [shape = 's32[1]{0}', space=sflag, size = 0x4, scoped, tag = 'scoped memory for tpu_custom_call.1']
    %8 = vsyncpa [#allocation3], 0
    // Predicated region
    $region2: #{tpu_custom_call.1} parent=1 // pred_check
      _
    $region3: #{tpu_custom_call.1} parent=1 // pred_check_branch
      %10 = sbr.rel (0) target = $region5
    $region4: #{tpu_custom_call.1} parent=1 // pred_region
      _
    $region5: #{tpu_custom_call.1} parent=1 // pred_fallthru
      _
    // Predicated region
    $region6: #{tpu_custom_call.1} parent=1 // pred_check
      _
    $region7: #{tpu_custom_call.1} parent=1 // pred_check_branch
      %12 = sbr.rel (0) target = $region9
    $region8: #{tpu_custom_call.1} parent=1 // pred_region
      _
    $region9: #{tpu_custom_call.1} parent=1 // pred_fallthru
      _
    // Predicated region
    $region10: #{tpu_custom_call.1} parent=1 // pred_check
      _
    $region11: #{tpu_custom_call.1} parent=1 // pred_check_branch
      %14 = sbr.rel (0) target = $region13
    $region12: #{tpu_custom_call.1} parent=1 // pred_region
      _
    $region13: #{tpu_custom_call.1} parent=1 // pred_fallthru
      _
    %v15 = vld [vmem:[%s0] sm:$0xff]
    %v16 = vld [vmem:[%s1] sm:$0xff]
    %v17 = vld [vmem:[%s1 + $0x8] sm:$0xff]
    %v18 = vld [vmem:[%s1 + $0x10] sm:$0xff]
    %v19 = vld [vmem:[%s1 + $0x18] sm:$0xff]
    %v20 = vld [vmem:[%s1 + $0x20] sm:$0xff]
    %v21 = vld [vmem:[%s1 + $0x28] sm:$0xff]
    %v22 = vld [vmem:[%s1 + $0x30] sm:$0xff]
    %v23 = vld [vmem:[%s1 + $0x38] sm:$0xff]
    %v24 = vld [vmem:[%s1 + $0x40] sm:$0x1]
    %vm25 = vcmask 64512
    %v27 = vsel %vm25, %v16, 0
    %v30 = vsel %vm25, %v17, 0
    %v33 = vsel %vm25, %v18, 0
    %v36 = vsel %vm25, %v19, 0
    %v39 = vsel %vm25, %v20, 0
    %v42 = vsel %vm25, %v21, 0
    %v45 = vsel %vm25, %v22, 0
    %v48 = vsel %vm25, %v23, 0
    %v51 = vsel %vm25, %v24, 0
    %53 = vmatprep.subr.mxu0 0.0
    %v54 = vand.u32 %v15, 4294901760
    %55 = vmatpush1.msra.mxu0 %v54
    %56 = vmatprep.subr.mxu0 0.0
    %57 = vmatpush1.msra.mxu0 0.0
    %58 = vmatprep.subr.mxu0 0.0
    %59 = vmatpush1.msra.mxu0 0.0
    %60 = vmatprep.subr.mxu0 0.0
    %61 = vmatpush1.msra.mxu0 0.0
    %62 = vmatprep.subr.mxu0 0.0
    %63 = vmatpush1.msra.mxu0 0.0
    %64 = vmatprep.subr.mxu0 0.0
    %65 = vmatpush1.msra.mxu0 0.0
    %66 = vmatprep.subr.mxu0 0.0
    %67 = vmatpush1.msra.mxu0 0.0
    %68 = vmatprep.subr.mxu0 0.0
    %69 = vmatpush1.msra.mxu0 0.0
    %70 = vmatprep.subr.mxu0 0.0
    %71 = vmatpush1.msra.mxu0 0.0
    %72 = vmatprep.subr.mxu0 0.0
    %73 = vmatpush1.msra.mxu0 0.0
    %74 = vmatprep.subr.mxu0 0.0
    %75 = vmatpush1.msra.mxu0 0.0
    %76 = vmatprep.subr.mxu0 0.0
    %77 = vmatpush1.msra.mxu0 0.0
    %78 = vmatprep.subr.mxu0 0.0
    %79 = vmatpush1.msra.mxu0 0.0
    %80 = vmatprep.subr.mxu0 0.0
    %81 = vmatpush1.msra.mxu0 0.0
    %82 = vmatprep.subr.mxu0 0.0
    %83 = vmatpush1.msra.mxu0 0.0
    %84 = vmatprep.subr.mxu0 0.0
    %85 = vmatpush1.msra.mxu0 0.0
    %86 = vmatprep.subr.mxu0 0.0
    %87 = vmatpush1.msra.mxu0 0.0
    %88 = vmatprep.subr.mxu0 0.0
    %89 = vmatpush1.msra.mxu0 0.0
    %90 = vmatprep.subr.mxu0 0.0
    %91 = vmatpush1.msra.mxu0 0.0
    %92 = vmatprep.subr.mxu0 0.0
    %93 = vmatpush1.msra.mxu0 0.0
    %94 = vmatprep.subr.mxu0 0.0
    %95 = vmatpush1.msra.mxu0 0.0
    %96 = vmatprep.subr.mxu0 0.0
    %97 = vmatpush1.msra.mxu0 0.0
    %98 = vmatprep.subr.mxu0 0.0
    %99 = vmatpush1.msra.mxu0 0.0
    %100 = vmatprep.subr.mxu0 0.0
    %101 = vmatpush1.msra.mxu0 0.0
    %102 = vmatprep.subr.mxu0 0.0
    %103 = vmatpush1.msra.mxu0 0.0
    %104 = vmatprep.subr.mxu0 0.0
    %105 = vmatpush1.msra.mxu0 0.0
    %106 = vmatprep.subr.mxu0 0.0
    %107 = vmatpush1.msra.mxu0 0.0
    %108 = vmatprep.subr.mxu0 0.0
    %109 = vmatpush1.msra.mxu0 0.0
    %110 = vmatprep.subr.mxu0 0.0
    %111 = vmatpush1.msra.mxu0 0.0
    %112 = vmatprep.subr.mxu0 0.0
    %113 = vmatpush1.msra.mxu0 0.0
    %114 = vmatprep.subr.mxu0 0.0
    %115 = vmatpush1.msra.mxu0 0.0
    %116 = vmatprep.subr.mxu0 0.0
    %117 = vmatpush1.msra.mxu0 0.0
    %118 = vmatprep.mubr.f32.mxu0 0.0
    %v119 = vand.u32 %v27, 4294901760
    %v120 = vsub.f32 %v27, %v119
    %v121 = vand.u32 %v120, 4294901760
    %v122 = vsub.f32 %v120, %v121
    %v123 = vand.u32 %v122, 4294901760
    %124 = vmatmul.mubr.f32.gmra.mrb[0].mxu0 %v123
    %v125 = vpop.f32.mrb[0].mxu0
    %v126 = vadd.f32 0.0, %v125
    %v127 = vpop.f32.mrb[0].mxu0
    %128 = vmatprep.mubr.f32.mxu0 0.0
    %v129 = vand.u32 %v30, 4294901760
    %v130 = vsub.f32 %v30, %v129
    %v131 = vand.u32 %v130, 4294901760
    %v132 = vsub.f32 %v130, %v131
    %v133 = vand.u32 %v132, 4294901760
    %134 = vmatmul.mubr.f32.gmra.mrb[0].mxu0 %v133
    %v135 = vpop.f32.mrb[0].mxu0
    %v136 = vadd.f32 0.0, %v135
    %v137 = vpop.f32.mrb[0].mxu0
    %138 = vmatprep.mubr.f32.mxu0 0.0
    %v139 = vand.u32 %v33, 4294901760
    %v140 = vsub.f32 %v33, %v139
    %v141 = vand.u32 %v140, 4294901760
    %v142 = vsub.f32 %v140, %v141
    %v143 = vand.u32 %v142, 4294901760
    %144 = vmatmul.mubr.f32.gmra.mrb[0].mxu0 %v143
    %v145 = vpop.f32.mrb[0].mxu0
    %v146 = vadd.f32 0.0, %v145
    %v147 = vpop.f32.mrb[0].mxu0
    %148 = vmatprep.mubr.f32.mxu0 0.0
    %v149 = vand.u32 %v36, 4294901760
    %v150 = vsub.f32 %v36, %v149
    %v151 = vand.u32 %v150, 4294901760
    %v152 = vsub.f32 %v150, %v151
    %v153 = vand.u32 %v152, 4294901760
    %154 = vmatmul.mubr.f32.gmra.mrb[0].mxu0 %v153
    %v155 = vpop.f32.mrb[0].mxu0
    %v156 = vadd.f32 0.0, %v155
    %v157 = vpop.f32.mrb[0].mxu0
    %158 = vmatprep.mubr.f32.mxu0 0.0
    %v159 = vand.u32 %v39, 4294901760
    %v160 = vsub.f32 %v39, %v159
    %v161 = vand.u32 %v160, 4294901760
    %v162 = vsub.f32 %v160, %v161
    %v163 = vand.u32 %v162, 4294901760
    %164 = vmatmul.mubr.f32.gmra.mrb[0].mxu0 %v163
    %v165 = vpop.f32.mrb[0].mxu0
    %v166 = vadd.f32 0.0, %v165
    %v167 = vpop.f32.mrb[0].mxu0
    %168 = vmatprep.mubr.f32.mxu0 0.0
    %v169 = vand.u32 %v42, 4294901760
    %v170 = vsub.f32 %v42, %v169
    %v171 = vand.u32 %v170, 4294901760
    %v172 = vsub.f32 %v170, %v171
    %v173 = vand.u32 %v172, 4294901760
    %174 = vmatmul.mubr.f32.gmra.mrb[0].mxu0 %v173
    %v175 = vpop.f32.mrb[0].mxu0
    %v176 = vadd.f32 0.0, %v175
    %v177 = vpop.f32.mrb[0].mxu0
    %178 = vmatprep.mubr.f32.mxu0 0.0
    %v179 = vand.u32 %v45, 4294901760
    %v180 = vsub.f32 %v45, %v179
    %v181 = vand.u32 %v180, 4294901760
    %v182 = vsub.f32 %v180, %v181
    %v183 = vand.u32 %v182, 4294901760
    %184 = vmatmul.mubr.f32.gmra.mrb[0].mxu0 %v183
    %v185 = vpop.f32.mrb[0].mxu0
    %v186 = vadd.f32 0.0, %v185
    %v187 = vpop.f32.mrb[0].mxu0
    %188 = vmatprep.mubr.f32.mxu0 0.0
    %v189 = vand.u32 %v48, 4294901760
    %v190 = vsub.f32 %v48, %v189
    %v191 = vand.u32 %v190, 4294901760
    %v192 = vsub.f32 %v190, %v191
    %v193 = vand.u32 %v192, 4294901760
    %194 = vmatmul.mubr.f32.gmra.mrb[0].mxu0 %v193
    %v195 = vpop.f32.mrb[0].mxu0
    %v196 = vadd.f32 0.0, %v195
    %v197 = vpop.f32.mrb[0].mxu0
    %198 = vmatprep.mubr.f32.mxu0 0.0
    %v199 = vand.u32 %v51, 4294901760
    %v200 = vsub.f32 %v51, %v199
    %v201 = vand.u32 %v200, 4294901760
    %v202 = vsub.f32 %v200, %v201
    %v203 = vand.u32 %v202, 4294901760
    %204 = vmatmul.mubr.f32.gmra.mrb[0].mxu0 %v203
    %v205 = vpop.f32.mrb[0].mxu0
    %v206 = vadd.f32 0.0, %v205
    %v207 = vpop.f32.mrb[0].mxu0
    %208 = vdwg.mxu0
    %209 = vmatprep.subr.mxu0 0.0
    %v210 = vand.u32 %v15, 4294901760
    %v211 = vsub.f32 %v15, %v210
    %v212 = vand.u32 %v211, 4294901760
    %v213 = vsub.f32 %v211, %v212
    %v214 = vand.u32 %v213, 4294901760
    %215 = vmatpush1.msra.mxu0 %v214
    %216 = vmatprep.subr.mxu0 0.0
    %217 = vmatpush1.msra.mxu0 0.0
    %218 = vmatprep.subr.mxu0 0.0
    %219 = vmatpush1.msra.mxu0 0.0
    %220 = vmatprep.subr.mxu0 0.0
    %221 = vmatpush1.msra.mxu0 0.0
    %222 = vmatprep.subr.mxu0 0.0
    %223 = vmatpush1.msra.mxu0 0.0
    %224 = vmatprep.subr.mxu0 0.0
    %225 = vmatpush1.msra.mxu0 0.0
    %226 = vmatprep.subr.mxu0 0.0
    %227 = vmatpush1.msra.mxu0 0.0
    %228 = vmatprep.subr.mxu0 0.0
    %229 = vmatpush1.msra.mxu0 0.0
    %230 = vmatprep.subr.mxu0 0.0
    %231 = vmatpush1.msra.mxu0 0.0
    %232 = vmatprep.subr.mxu0 0.0
    %233 = vmatpush1.msra.mxu0 0.0
    %234 = vmatprep.subr.mxu0 0.0
    %235 = vmatpush1.msra.mxu0 0.0
    %236 = vmatprep.subr.mxu0 0.0
    %237 = vmatpush1.msra.mxu0 0.0
    %238 = vmatprep.subr.mxu0 0.0
    %239 = vmatpush1.msra.mxu0 0.0
    %240 = vmatprep.subr.mxu0 0.0
    %241 = vmatpush1.msra.mxu0 0.0
    %242 = vmatprep.subr.mxu0 0.0
    %243 = vmatpush1.msra.mxu0 0.0
    %244 = vmatprep.subr.mxu0 0.0
    %245 = vmatpush1.msra.mxu0 0.0
    %246 = vmatprep.subr.mxu0 0.0
    %247 = vmatpush1.msra.mxu0 0.0
    %248 = vmatprep.subr.mxu0 0.0
    %249 = vmatpush1.msra.mxu0 0.0
    %250 = vmatprep.subr.mxu0 0.0
    %251 = vmatpush1.msra.mxu0 0.0
    %252 = vmatprep.subr.mxu0 0.0
    %253 = vmatpush1.msra.mxu0 0.0
    %254 = vmatprep.subr.mxu0 0.0
    %255 = vmatpush1.msra.mxu0 0.0
    %256 = vmatprep.subr.mxu0 0.0
    %257 = vmatpush1.msra.mxu0 0.0
    %258 = vmatprep.subr.mxu0 0.0
    %259 = vmatpush1.msra.mxu0 0.0
    %260 = vmatprep.subr.mxu0 0.0
    %261 = vmatpush1.msra.mxu0 0.0
    %262 = vmatprep.subr.mxu0 0.0
    %263 = vmatpush1.msra.mxu0 0.0
    %264 = vmatprep.subr.mxu0 0.0
    %265 = vmatpush1.msra.mxu0 0.0
    %266 = vmatprep.subr.mxu0 0.0
    %267 = vmatpush1.msra.mxu0 0.0
    %268 = vmatprep.subr.mxu0 0.0
    %269 = vmatpush1.msra.mxu0 0.0
    %270 = vmatprep.subr.mxu0 0.0
    %271 = vmatpush1.msra.mxu0 0.0
    %272 = vmatprep.subr.mxu0 0.0
    %273 = vmatpush1.msra.mxu0 0.0
    %274 = vmatprep.subr.mxu0 0.0
    %275 = vmatpush1.msra.mxu0 0.0
    %276 = vmatprep.subr.mxu0 0.0
    %277 = vmatpush1.msra.mxu0 0.0
    %278 = vmatprep.mubr.f32.mxu0 0.0
    %v279 = vand.u32 %v27, 4294901760
    %280 = vmatmul.mubr.f32.gmra.mrb[0].mxu0 %v279
    %v281 = vpop.f32.mrb[0].mxu0
    %v282 = vadd.f32 %v126, %v281
    %v283 = vpop.f32.mrb[0].mxu0
    %284 = vmatprep.mubr.f32.mxu0 0.0
    %v285 = vand.u32 %v30, 4294901760
    %286 = vmatmul.mubr.f32.gmra.mrb[0].mxu0 %v285
    %v287 = vpop.f32.mrb[0].mxu0
    %v288 = vadd.f32 %v136, %v287
    %v289 = vpop.f32.mrb[0].mxu0
    %290 = vmatprep.mubr.f32.mxu0 0.0
    %v291 = vand.u32 %v33, 4294901760
    %292 = vmatmul.mubr.f32.gmra.mrb[0].mxu0 %v291
    %v293 = vpop.f32.mrb[0].mxu0
    %v294 = vadd.f32 %v146, %v293
    %v295 = vpop.f32.mrb[0].mxu0
    %296 = vmatprep.mubr.f32.mxu0 0.0
    %v297 = vand.u32 %v36, 4294901760
    %298 = vmatmul.mubr.f32.gmra.mrb[0].mxu0 %v297
    %v299 = vpop.f32.mrb[0].mxu0
    %v300 = vadd.f32 %v156, %v299
    %v301 = vpop.f32.mrb[0].mxu0
    %302 = vmatprep.mubr.f32.mxu0 0.0
    %v303 = vand.u32 %v39, 4294901760
    %304 = vmatmul.mubr.f32.gmra.mrb[0].mxu0 %v303
    %v305 = vpop.f32.mrb[0].mxu0
    %v306 = vadd.f32 %v166, %v305
    %v307 = vpop.f32.mrb[0].mxu0
    %308 = vmatprep.mubr.f32.mxu0 0.0
    %v309 = vand.u32 %v42, 4294901760
    %310 = vmatmul.mubr.f32.gmra.mrb[0].mxu0 %v309
    %v311 = vpop.f32.mrb[0].mxu0
    %v312 = vadd.f32 %v176, %v311
    %v313 = vpop.f32.mrb[0].mxu0
    %314 = vmatprep.mubr.f32.mxu0 0.0
    %v315 = vand.u32 %v45, 4294901760
    %316 = vmatmul.mubr.f32.gmra.mrb[0].mxu0 %v315
    %v317 = vpop.f32.mrb[0].mxu0
    %v318 = vadd.f32 %v186, %v317
    %v319 = vpop.f32.mrb[0].mxu0
    %320 = vmatprep.mubr.f32.mxu0 0.0
    %v321 = vand.u32 %v48, 4294901760
    %322 = vmatmul.mubr.f32.gmra.mrb[0].mxu0 %v321
    %v323 = vpop.f32.mrb[0].mxu0
    %v324 = vadd.f32 %v196, %v323
    %v325 = vpop.f32.mrb[0].mxu0
    %326 = vmatprep.mubr.f32.mxu0 0.0
    %v327 = vand.u32 %v51, 4294901760
    %328 = vmatmul.mubr.f32.gmra.mrb[0].mxu0 %v327
    %v329 = vpop.f32.mrb[0].mxu0
    %v330 = vadd.f32 %v206, %v329
    %v331 = vpop.f32.mrb[0].mxu0
    %332 = vdwg.mxu0
    %333 = vmatprep.subr.mxu0 0.0
    %v334 = vand.u32 %v15, 4294901760
    %v335 = vsub.f32 %v15, %v334
    %336 = vmatpush1.msra.mxu0 %v335
    %337 = vmatprep.subr.mxu0 0.0
    %338 = vmatpush1.msra.mxu0 0.0
    %339 = vmatprep.subr.mxu0 0.0
    %340 = vmatpush1.msra.mxu0 0.0
    %341 = vmatprep.subr.mxu0 0.0
    %342 = vmatpush1.msra.mxu0 0.0
    %343 = vmatprep.subr.mxu0 0.0
    %344 = vmatpush1.msra.mxu0 0.0
    %345 = vmatprep.subr.mxu0 0.0
    %346 = vmatpush1.msra.mxu0 0.0
    %347 = vmatprep.subr.mxu0 0.0
    %348 = vmatpush1.msra.mxu0 0.0
    %349 = vmatprep.subr.mxu0 0.0
    %350 = vmatpush1.msra.mxu0 0.0
    %351 = vmatprep.subr.mxu0 0.0
    %352 = vmatpush1.msra.mxu0 0.0
    %353 = vmatprep.subr.mxu0 0.0
    %354 = vmatpush1.msra.mxu0 0.0
    %355 = vmatprep.subr.mxu0 0.0
    %356 = vmatpush1.msra.mxu0 0.0
    %357 = vmatprep.subr.mxu0 0.0
    %358 = vmatpush1.msra.mxu0 0.0
    %359 = vmatprep.subr.mxu0 0.0
    %360 = vmatpush1.msra.mxu0 0.0
    %361 = vmatprep.subr.mxu0 0.0
    %362 = vmatpush1.msra.mxu0 0.0
    %363 = vmatprep.subr.mxu0 0.0
    %364 = vmatpush1.msra.mxu0 0.0
    %365 = vmatprep.subr.mxu0 0.0
    %366 = vmatpush1.msra.mxu0 0.0
    %367 = vmatprep.subr.mxu0 0.0
    %368 = vmatpush1.msra.mxu0 0.0
    %369 = vmatprep.subr.mxu0 0.0
    %370 = vmatpush1.msra.mxu0 0.0
    %371 = vmatprep.subr.mxu0 0.0
    %372 = vmatpush1.msra.mxu0 0.0
    %373 = vmatprep.subr.mxu0 0.0
    %374 = vmatpush1.msra.mxu0 0.0
    %375 = vmatprep.subr.mxu0 0.0
    %376 = vmatpush1.msra.mxu0 0.0
    %377 = vmatprep.subr.mxu0 0.0
    %378 = vmatpush1.msra.mxu0 0.0
    %379 = vmatprep.subr.mxu0 0.0
    %380 = vmatpush1.msra.mxu0 0.0
    %381 = vmatprep.subr.mxu0 0.0
    %382 = vmatpush1.msra.mxu0 0.0
    %383 = vmatprep.subr.mxu0 0.0
    %384 = vmatpush1.msra.mxu0 0.0
    %385 = vmatprep.subr.mxu0 0.0
    %386 = vmatpush1.msra.mxu0 0.0
    %387 = vmatprep.subr.mxu0 0.0
    %388 = vmatpush1.msra.mxu0 0.0
    %389 = vmatprep.subr.mxu0 0.0
    %390 = vmatpush1.msra.mxu0 0.0
    %391 = vmatprep.subr.mxu0 0.0
    %392 = vmatpush1.msra.mxu0 0.0
    %393 = vmatprep.subr.mxu0 0.0
    %394 = vmatpush1.msra.mxu0 0.0
    %395 = vmatprep.subr.mxu0 0.0
    %396 = vmatpush1.msra.mxu0 0.0
    %397 = vmatprep.subr.mxu0 0.0
    %398 = vmatpush1.msra.mxu0 0.0
    %399 = vmatprep.mubr.f32.mxu0 0.0
    %v400 = vand.u32 %v27, 4294901760
    %v401 = vsub.f32 %v27, %v400
    %402 = vmatmul.mubr.f32.gmra.mrb[0].mxu0 %v401
    %v403 = vpop.f32.mrb[0].mxu0
    %v404 = vadd.f32 %v282, %v403
    %v405 = vpop.f32.mrb[0].mxu0
    %406 = vmatprep.mubr.f32.mxu0 0.0
    %v407 = vand.u32 %v30, 4294901760
    %v408 = vsub.f32 %v30, %v407
    %409 = vmatmul.mubr.f32.gmra.mrb[0].mxu0 %v408
    %v410 = vpop.f32.mrb[0].mxu0
    %v411 = vadd.f32 %v288, %v410
    %v412 = vpop.f32.mrb[0].mxu0
    %413 = vmatprep.mubr.f32.mxu0 0.0
    %v414 = vand.u32 %v33, 4294901760
    %v415 = vsub.f32 %v33, %v414
    %416 = vmatmul.mubr.f32.gmra.mrb[0].mxu0 %v415
    %v417 = vpop.f32.mrb[0].mxu0
    %v418 = vadd.f32 %v294, %v417
    %v419 = vpop.f32.mrb[0].mxu0
    %420 = vmatprep.mubr.f32.mxu0 0.0
    %v421 = vand.u32 %v36, 4294901760
    %v422 = vsub.f32 %v36, %v421
    %423 = vmatmul.mubr.f32.gmra.mrb[0].mxu0 %v422
    %v424 = vpop.f32.mrb[0].mxu0
    %v425 = vadd.f32 %v300, %v424
    %v426 = vpop.f32.mrb[0].mxu0
    %427 = vmatprep.mubr.f32.mxu0 0.0
    %v428 = vand.u32 %v39, 4294901760
    %v429 = vsub.f32 %v39, %v428
    %430 = vmatmul.mubr.f32.gmra.mrb[0].mxu0 %v429
    %v431 = vpop.f32.mrb[0].mxu0
    %v432 = vadd.f32 %v306, %v431
    %v433 = vpop.f32.mrb[0].mxu0
    %434 = vmatprep.mubr.f32.mxu0 0.0
    %v435 = vand.u32 %v42, 4294901760
    %v436 = vsub.f32 %v42, %v435
    %437 = vmatmul.mubr.f32.gmra.mrb[0].mxu0 %v436
    %v438 = vpop.f32.mrb[0].mxu0
    %v439 = vadd.f32 %v312, %v438
    %v440 = vpop.f32.mrb[0].mxu0
    %441 = vmatprep.mubr.f32.mxu0 0.0
    %v442 = vand.u32 %v45, 4294901760
    %v443 = vsub.f32 %v45, %v442
    %444 = vmatmul.mubr.f32.gmra.mrb[0].mxu0 %v443
    %v445 = vpop.f32.mrb[0].mxu0
    %v446 = vadd.f32 %v318, %v445
    %v447 = vpop.f32.mrb[0].mxu0
    %448 = vmatprep.mubr.f32.mxu0 0.0
    %v449 = vand.u32 %v48, 4294901760
    %v450 = vsub.f32 %v48, %v449
    %451 = vmatmul.mubr.f32.gmra.mrb[0].mxu0 %v450
    %v452 = vpop.f32.mrb[0].mxu0
    %v453 = vadd.f32 %v324, %v452
    %v454 = vpop.f32.mrb[0].mxu0
    %455 = vmatprep.mubr.f32.mxu0 0.0
    %v456 = vand.u32 %v51, 4294901760
    %v457 = vsub.f32 %v51, %v456
    %458 = vmatmul.mubr.f32.gmra.mrb[0].mxu0 %v457
    %v459 = vpop.f32.mrb[0].mxu0
    %v460 = vadd.f32 %v330, %v459
    %v461 = vpop.f32.mrb[0].mxu0
    %462 = vdwg.mxu0
    %463 = vmatprep.subr.mxu0 0.0
    %v464 = vand.u32 %v15, 4294901760
    %465 = vmatpush1.msra.mxu0 %v464
    %466 = vmatprep.subr.mxu0 0.0
    %467 = vmatpush1.msra.mxu0 0.0
    %468 = vmatprep.subr.mxu0 0.0
    %469 = vmatpush1.msra.mxu0 0.0
    %470 = vmatprep.subr.mxu0 0.0
    %471 = vmatpush1.msra.mxu0 0.0
    %472 = vmatprep.subr.mxu0 0.0
    %473 = vmatpush1.msra.mxu0 0.0
    %474 = vmatprep.subr.mxu0 0.0
    %475 = vmatpush1.msra.mxu0 0.0
    %476 = vmatprep.subr.mxu0 0.0
    %477 = vmatpush1.msra.mxu0 0.0
    %478 = vmatprep.subr.mxu0 0.0
    %479 = vmatpush1.msra.mxu0 0.0
    %480 = vmatprep.subr.mxu0 0.0
    %481 = vmatpush1.msra.mxu0 0.0
    %482 = vmatprep.subr.mxu0 0.0
    %483 = vmatpush1.msra.mxu0 0.0
    %484 = vmatprep.subr.mxu0 0.0
    %485 = vmatpush1.msra.mxu0 0.0
    %486 = vmatprep.subr.mxu0 0.0
    %487 = vmatpush1.msra.mxu0 0.0
    %488 = vmatprep.subr.mxu0 0.0
    %489 = vmatpush1.msra.mxu0 0.0
    %490 = vmatprep.subr.mxu0 0.0
    %491 = vmatpush1.msra.mxu0 0.0
    %492 = vmatprep.subr.mxu0 0.0
    %493 = vmatpush1.msra.mxu0 0.0
    %494 = vmatprep.subr.mxu0 0.0
    %495 = vmatpush1.msra.mxu0 0.0
    %496 = vmatprep.subr.mxu0 0.0
    %497 = vmatpush1.msra.mxu0 0.0
    %498 = vmatprep.subr.mxu0 0.0
    %499 = vmatpush1.msra.mxu0 0.0
    %500 = vmatprep.subr.mxu0 0.0
    %501 = vmatpush1.msra.mxu0 0.0
    %502 = vmatprep.subr.mxu0 0.0
    %503 = vmatpush1.msra.mxu0 0.0
    %504 = vmatprep.subr.mxu0 0.0
    %505 = vmatpush1.msra.mxu0 0.0
    %506 = vmatprep.subr.mxu0 0.0
    %507 = vmatpush1.msra.mxu0 0.0
    %508 = vmatprep.subr.mxu0 0.0
    %509 = vmatpush1.msra.mxu0 0.0
    %510 = vmatprep.subr.mxu0 0.0
    %511 = vmatpush1.msra.mxu0 0.0
    %512 = vmatprep.subr.mxu0 0.0
    %513 = vmatpush1.msra.mxu0 0.0
    %514 = vmatprep.subr.mxu0 0.0
    %515 = vmatpush1.msra.mxu0 0.0
    %516 = vmatprep.subr.mxu0 0.0
    %517 = vmatpush1.msra.mxu0 0.0
    %518 = vmatprep.subr.mxu0 0.0
    %519 = vmatpush1.msra.mxu0 0.0
    %520 = vmatprep.subr.mxu0 0.0
    %521 = vmatpush1.msra.mxu0 0.0
    %522 = vmatprep.subr.mxu0 0.0
    %523 = vmatpush1.msra.mxu0 0.0
    %524 = vmatprep.subr.mxu0 0.0
    %525 = vmatpush1.msra.mxu0 0.0
    %526 = vmatprep.subr.mxu0 0.0
    %527 = vmatpush1.msra.mxu0 0.0
    %528 = vmatprep.mubr.f32.mxu0 0.0
    %v529 = vand.u32 %v27, 4294901760
    %v530 = vsub.f32 %v27, %v529
    %v531 = vand.u32 %v530, 4294901760
    %532 = vmatmul.mubr.f32.gmra.mrb[0].mxu0 %v531
    %v533 = vpop.f32.mrb[0].mxu0
    %v534 = vadd.f32 %v404, %v533
    %v535 = vpop.f32.mrb[0].mxu0
    %536 = vmatprep.mubr.f32.mxu0 0.0
    %v537 = vand.u32 %v30, 4294901760
    %v538 = vsub.f32 %v30, %v537
    %v539 = vand.u32 %v538, 4294901760
    %540 = vmatmul.mubr.f32.gmra.mrb[0].mxu0 %v539
    %v541 = vpop.f32.mrb[0].mxu0
    %v542 = vadd.f32 %v411, %v541
    %v543 = vpop.f32.mrb[0].mxu0
    %544 = vmatprep.mubr.f32.mxu0 0.0
    %v545 = vand.u32 %v33, 4294901760
    %v546 = vsub.f32 %v33, %v545
    %v547 = vand.u32 %v546, 4294901760
    %548 = vmatmul.mubr.f32.gmra.mrb[0].mxu0 %v547
    %v549 = vpop.f32.mrb[0].mxu0
    %v550 = vadd.f32 %v418, %v549
    %v551 = vpop.f32.mrb[0].mxu0
    %552 = vmatprep.mubr.f32.mxu0 0.0
    %v553 = vand.u32 %v36, 4294901760
    %v554 = vsub.f32 %v36, %v553
    %v555 = vand.u32 %v554, 4294901760
    %556 = vmatmul.mubr.f32.gmra.mrb[0].mxu0 %v555
    %v557 = vpop.f32.mrb[0].mxu0
    %v558 = vadd.f32 %v425, %v557
    %v559 = vpop.f32.mrb[0].mxu0
    %560 = vmatprep.mubr.f32.mxu0 0.0
    %v561 = vand.u32 %v39, 4294901760
    %v562 = vsub.f32 %v39, %v561
    %v563 = vand.u32 %v562, 4294901760
    %564 = vmatmul.mubr.f32.gmra.mrb[0].mxu0 %v563
    %v565 = vpop.f32.mrb[0].mxu0
    %v566 = vadd.f32 %v432, %v565
    %v567 = vpop.f32.mrb[0].mxu0
    %568 = vmatprep.mubr.f32.mxu0 0.0
    %v569 = vand.u32 %v42, 4294901760
    %v570 = vsub.f32 %v42, %v569
    %v571 = vand.u32 %v570, 4294901760
    %572 = vmatmul.mubr.f32.gmra.mrb[0].mxu0 %v571
    %v573 = vpop.f32.mrb[0].mxu0
    %v574 = vadd.f32 %v439, %v573
    %v575 = vpop.f32.mrb[0].mxu0
    %576 = vmatprep.mubr.f32.mxu0 0.0
    %v577 = vand.u32 %v45, 4294901760
    %v578 = vsub.f32 %v45, %v577
    %v579 = vand.u32 %v578, 4294901760
    %580 = vmatmul.mubr.f32.gmra.mrb[0].mxu0 %v579
    %v581 = vpop.f32.mrb[0].mxu0
    %v582 = vadd.f32 %v446, %v581
    %v583 = vpop.f32.mrb[0].mxu0
    %584 = vmatprep.mubr.f32.mxu0 0.0
    %v585 = vand.u32 %v48, 4294901760
    %v586 = vsub.f32 %v48, %v585
    %v587 = vand.u32 %v586, 4294901760
    %588 = vmatmul.mubr.f32.gmra.mrb[0].mxu0 %v587
    %v589 = vpop.f32.mrb[0].mxu0
    %v590 = vadd.f32 %v453, %v589
    %v591 = vpop.f32.mrb[0].mxu0
    %592 = vmatprep.mubr.f32.mxu0 0.0
    %v593 = vand.u32 %v51, 4294901760
    %v594 = vsub.f32 %v51, %v593
    %v595 = vand.u32 %v594, 4294901760
    %596 = vmatmul.mubr.f32.gmra.mrb[0].mxu0 %v595
    %v597 = vpop.f32.mrb[0].mxu0
    %v598 = vadd.f32 %v460, %v597
    %v599 = vpop.f32.mrb[0].mxu0
    %600 = vdwg.mxu0
    %601 = vmatprep.subr.mxu0 0.0
    %v602 = vand.u32 %v15, 4294901760
    %v603 = vsub.f32 %v15, %v602
    %v604 = vand.u32 %v603, 4294901760
    %605 = vmatpush1.msra.mxu0 %v604
    %606 = vmatprep.subr.mxu0 0.0
    %607 = vmatpush1.msra.mxu0 0.0
    %608 = vmatprep.subr.mxu0 0.0
    %609 = vmatpush1.msra.mxu0 0.0
    %610 = vmatprep.subr.mxu0 0.0
    %611 = vmatpush1.msra.mxu0 0.0
    %612 = vmatprep.subr.mxu0 0.0
    %613 = vmatpush1.msra.mxu0 0.0
    %614 = vmatprep.subr.mxu0 0.0
    %615 = vmatpush1.msra.mxu0 0.0
    %616 = vmatprep.subr.mxu0 0.0
    %617 = vmatpush1.msra.mxu0 0.0
    %618 = vmatprep.subr.mxu0 0.0
    %619 = vmatpush1.msra.mxu0 0.0
    %620 = vmatprep.subr.mxu0 0.0
    %621 = vmatpush1.msra.mxu0 0.0
    %622 = vmatprep.subr.mxu0 0.0
    %623 = vmatpush1.msra.mxu0 0.0
    %624 = vmatprep.subr.mxu0 0.0
    %625 = vmatpush1.msra.mxu0 0.0
    %626 = vmatprep.subr.mxu0 0.0
    %627 = vmatpush1.msra.mxu0 0.0
    %628 = vmatprep.subr.mxu0 0.0
    %629 = vmatpush1.msra.mxu0 0.0
    %630 = vmatprep.subr.mxu0 0.0
    %631 = vmatpush1.msra.mxu0 0.0
    %632 = vmatprep.subr.mxu0 0.0
    %633 = vmatpush1.msra.mxu0 0.0
    %634 = vmatprep.subr.mxu0 0.0
    %635 = vmatpush1.msra.mxu0 0.0
    %636 = vmatprep.subr.mxu0 0.0
    %637 = vmatpush1.msra.mxu0 0.0
    %638 = vmatprep.subr.mxu0 0.0
    %639 = vmatpush1.msra.mxu0 0.0
    %640 = vmatprep.subr.mxu0 0.0
    %641 = vmatpush1.msra.mxu0 0.0
    %642 = vmatprep.subr.mxu0 0.0
    %643 = vmatpush1.msra.mxu0 0.0
    %644 = vmatprep.subr.mxu0 0.0
    %645 = vmatpush1.msra.mxu0 0.0
    %646 = vmatprep.subr.mxu0 0.0
    %647 = vmatpush1.msra.mxu0 0.0
    %648 = vmatprep.subr.mxu0 0.0
    %649 = vmatpush1.msra.mxu0 0.0
    %650 = vmatprep.subr.mxu0 0.0
    %651 = vmatpush1.msra.mxu0 0.0
    %652 = vmatprep.subr.mxu0 0.0
    %653 = vmatpush1.msra.mxu0 0.0
    %654 = vmatprep.subr.mxu0 0.0
    %655 = vmatpush1.msra.mxu0 0.0
    %656 = vmatprep.subr.mxu0 0.0
    %657 = vmatpush1.msra.mxu0 0.0
    %658 = vmatprep.subr.mxu0 0.0
    %659 = vmatpush1.msra.mxu0 0.0
    %660 = vmatprep.subr.mxu0 0.0
    %661 = vmatpush1.msra.mxu0 0.0
    %662 = vmatprep.subr.mxu0 0.0
    %663 = vmatpush1.msra.mxu0 0.0
    %664 = vmatprep.subr.mxu0 0.0
    %665 = vmatpush1.msra.mxu0 0.0
    %666 = vmatprep.subr.mxu0 0.0
    %667 = vmatpush1.msra.mxu0 0.0
    %668 = vmatprep.mubr.f32.mxu0 0.0
    %v669 = vand.u32 %v27, 4294901760
    %670 = vmatmul.mubr.f32.gmra.mrb[0].mxu0 %v669
    %v671 = vpop.f32.mrb[0].mxu0
    %v672 = vadd.f32 %v534, %v671
    %v673 = vpop.f32.mrb[0].mxu0
    %674 = vmatprep.mubr.f32.mxu0 0.0
    %v675 = vand.u32 %v30, 4294901760
    %676 = vmatmul.mubr.f32.gmra.mrb[0].mxu0 %v675
    %v677 = vpop.f32.mrb[0].mxu0
    %v678 = vadd.f32 %v542, %v677
    %v679 = vpop.f32.mrb[0].mxu0
    %680 = vmatprep.mubr.f32.mxu0 0.0
    %v681 = vand.u32 %v33, 4294901760
    %682 = vmatmul.mubr.f32.gmra.mrb[0].mxu0 %v681
    %v683 = vpop.f32.mrb[0].mxu0
    %v684 = vadd.f32 %v550, %v683
    %v685 = vpop.f32.mrb[0].mxu0
    %686 = vmatprep.mubr.f32.mxu0 0.0
    %v687 = vand.u32 %v36, 4294901760
    %688 = vmatmul.mubr.f32.gmra.mrb[0].mxu0 %v687
    %v689 = vpop.f32.mrb[0].mxu0
    %v690 = vadd.f32 %v558, %v689
    %v691 = vpop.f32.mrb[0].mxu0
    %692 = vmatprep.mubr.f32.mxu0 0.0
    %v693 = vand.u32 %v39, 4294901760
    %694 = vmatmul.mubr.f32.gmra.mrb[0].mxu0 %v693
    %v695 = vpop.f32.mrb[0].mxu0
    %v696 = vadd.f32 %v566, %v695
    %v697 = vpop.f32.mrb[0].mxu0
    %698 = vmatprep.mubr.f32.mxu0 0.0
    %v699 = vand.u32 %v42, 4294901760
    %700 = vmatmul.mubr.f32.gmra.mrb[0].mxu0 %v699
    %v701 = vpop.f32.mrb[0].mxu0
    %v702 = vadd.f32 %v574, %v701
    %v703 = vpop.f32.mrb[0].mxu0
    %704 = vmatprep.mubr.f32.mxu0 0.0
    %v705 = vand.u32 %v45, 4294901760
    %706 = vmatmul.mubr.f32.gmra.mrb[0].mxu0 %v705
    %v707 = vpop.f32.mrb[0].mxu0
    %v708 = vadd.f32 %v582, %v707
    %v709 = vpop.f32.mrb[0].mxu0
    %710 = vmatprep.mubr.f32.mxu0 0.0
    %v711 = vand.u32 %v48, 4294901760
    %712 = vmatmul.mubr.f32.gmra.mrb[0].mxu0 %v711
    %v713 = vpop.f32.mrb[0].mxu0
    %v714 = vadd.f32 %v590, %v713
    %v715 = vpop.f32.mrb[0].mxu0
    %716 = vmatprep.mubr.f32.mxu0 0.0
    %v717 = vand.u32 %v51, 4294901760
    %718 = vmatmul.mubr.f32.gmra.mrb[0].mxu0 %v717
    %v719 = vpop.f32.mrb[0].mxu0
    %v720 = vadd.f32 %v598, %v719
    %v721 = vpop.f32.mrb[0].mxu0
    %722 = vdwg.mxu0
    %723 = vmatprep.subr.mxu0 0.0
    %v724 = vand.u32 %v15, 4294901760
    %725 = vmatpush1.msra.mxu0 %v724
    %726 = vmatprep.subr.mxu0 0.0
    %727 = vmatpush1.msra.mxu0 0.0
    %728 = vmatprep.subr.mxu0 0.0
    %729 = vmatpush1.msra.mxu0 0.0
    %730 = vmatprep.subr.mxu0 0.0
    %731 = vmatpush1.msra.mxu0 0.0
    %732 = vmatprep.subr.mxu0 0.0
    %733 = vmatpush1.msra.mxu0 0.0
    %734 = vmatprep.subr.mxu0 0.0
    %735 = vmatpush1.msra.mxu0 0.0
    %736 = vmatprep.subr.mxu0 0.0
    %737 = vmatpush1.msra.mxu0 0.0
    %738 = vmatprep.subr.mxu0 0.0
    %739 = vmatpush1.msra.mxu0 0.0
    %740 = vmatprep.subr.mxu0 0.0
    %741 = vmatpush1.msra.mxu0 0.0
    %742 = vmatprep.subr.mxu0 0.0
    %743 = vmatpush1.msra.mxu0 0.0
    %744 = vmatprep.subr.mxu0 0.0
    %745 = vmatpush1.msra.mxu0 0.0
    %746 = vmatprep.subr.mxu0 0.0
    %747 = vmatpush1.msra.mxu0 0.0
    %748 = vmatprep.subr.mxu0 0.0
    %749 = vmatpush1.msra.mxu0 0.0
    %750 = vmatprep.subr.mxu0 0.0
    %751 = vmatpush1.msra.mxu0 0.0
    %752 = vmatprep.subr.mxu0 0.0
    %753 = vmatpush1.msra.mxu0 0.0
    %754 = vmatprep.subr.mxu0 0.0
    %755 = vmatpush1.msra.mxu0 0.0
    %756 = vmatprep.subr.mxu0 0.0
    %757 = vmatpush1.msra.mxu0 0.0
    %758 = vmatprep.subr.mxu0 0.0
    %759 = vmatpush1.msra.mxu0 0.0
    %760 = vmatprep.subr.mxu0 0.0
    %761 = vmatpush1.msra.mxu0 0.0
    %762 = vmatprep.subr.mxu0 0.0
    %763 = vmatpush1.msra.mxu0 0.0
    %764 = vmatprep.subr.mxu0 0.0
    %765 = vmatpush1.msra.mxu0 0.0
    %766 = vmatprep.subr.mxu0 0.0
    %767 = vmatpush1.msra.mxu0 0.0
    %768 = vmatprep.subr.mxu0 0.0
    %769 = vmatpush1.msra.mxu0 0.0
    %770 = vmatprep.subr.mxu0 0.0
    %771 = vmatpush1.msra.mxu0 0.0
    %772 = vmatprep.subr.mxu0 0.0
    %773 = vmatpush1.msra.mxu0 0.0
    %774 = vmatprep.subr.mxu0 0.0
    %775 = vmatpush1.msra.mxu0 0.0
    %776 = vmatprep.subr.mxu0 0.0
    %777 = vmatpush1.msra.mxu0 0.0
    %778 = vmatprep.subr.mxu0 0.0
    %779 = vmatpush1.msra.mxu0 0.0
    %780 = vmatprep.subr.mxu0 0.0
    %781 = vmatpush1.msra.mxu0 0.0
    %782 = vmatprep.subr.mxu0 0.0
    %783 = vmatpush1.msra.mxu0 0.0
    %784 = vmatprep.subr.mxu0 0.0
    %785 = vmatpush1.msra.mxu0 0.0
    %786 = vmatprep.subr.mxu0 0.0
    %787 = vmatpush1.msra.mxu0 0.0
    %788 = vmatprep.mubr.f32.mxu0 0.0
    %v789 = vand.u32 %v27, 4294901760
    %790 = vmatmul.mubr.f32.gmra.mrb[0].mxu0 %v789
    %v791 = vpop.f32.mrb[0].mxu0
    %v792 = vadd.f32 %v672, %v791
    %v793 = vpop.f32.mrb[0].mxu0
    %794 = vmatprep.mubr.f32.mxu0 0.0
    %v795 = vand.u32 %v30, 4294901760
    %796 = vmatmul.mubr.f32.gmra.mrb[0].mxu0 %v795
    %v797 = vpop.f32.mrb[0].mxu0
    %v798 = vadd.f32 %v678, %v797
    %v799 = vpop.f32.mrb[0].mxu0
    %800 = vmatprep.mubr.f32.mxu0 0.0
    %v801 = vand.u32 %v33, 4294901760
    %802 = vmatmul.mubr.f32.gmra.mrb[0].mxu0 %v801
    %v803 = vpop.f32.mrb[0].mxu0
    %v804 = vadd.f32 %v684, %v803
    %v805 = vpop.f32.mrb[0].mxu0
    %806 = vmatprep.mubr.f32.mxu0 0.0
    %v807 = vand.u32 %v36, 4294901760
    %808 = vmatmul.mubr.f32.gmra.mrb[0].mxu0 %v807
    %v809 = vpop.f32.mrb[0].mxu0
    %v810 = vadd.f32 %v690, %v809
    %v811 = vpop.f32.mrb[0].mxu0
    %812 = vmatprep.mubr.f32.mxu0 0.0
    %v813 = vand.u32 %v39, 4294901760
    %814 = vmatmul.mubr.f32.gmra.mrb[0].mxu0 %v813
    %v815 = vpop.f32.mrb[0].mxu0
    %v816 = vadd.f32 %v696, %v815
    %v817 = vpop.f32.mrb[0].mxu0
    %818 = vmatprep.mubr.f32.mxu0 0.0
    %v819 = vand.u32 %v42, 4294901760
    %820 = vmatmul.mubr.f32.gmra.mrb[0].mxu0 %v819
    %v821 = vpop.f32.mrb[0].mxu0
    %v822 = vadd.f32 %v702, %v821
    %v823 = vpop.f32.mrb[0].mxu0
    %824 = vmatprep.mubr.f32.mxu0 0.0
    %v825 = vand.u32 %v45, 4294901760
    %826 = vmatmul.mubr.f32.gmra.mrb[0].mxu0 %v825
    %v827 = vpop.f32.mrb[0].mxu0
    %v828 = vadd.f32 %v708, %v827
    %v829 = vpop.f32.mrb[0].mxu0
    %830 = vmatprep.mubr.f32.mxu0 0.0
    %v831 = vand.u32 %v48, 4294901760
    %832 = vmatmul.mubr.f32.gmra.mrb[0].mxu0 %v831
    %v833 = vpop.f32.mrb[0].mxu0
    %v834 = vadd.f32 %v714, %v833
    %v835 = vpop.f32.mrb[0].mxu0
    %836 = vmatprep.mubr.f32.mxu0 0.0
    %v837 = vand.u32 %v51, 4294901760
    %838 = vmatmul.mubr.f32.gmra.mrb[0].mxu0 %v837
    %v839 = vpop.f32.mrb[0].mxu0
    %v840 = vadd.f32 %v720, %v839
    %v841 = vpop.f32.mrb[0].mxu0
    %842 = vdwg.mxu0
    %v843 = vmul.f32 %v792, 1.442695
    %v844 = vpow.pop %v843
    %v845 = vmul.f32 %v798, 1.442695
    %v846 = vpow.pop %v845
    %v847 = vmul.f32 %v804, 1.442695
    %v848 = vpow.pop %v847
    %v849 = vmul.f32 %v810, 1.442695
    %v850 = vpow.pop %v849
    %v851 = vmul.f32 %v816, 1.442695
    %v852 = vpow.pop %v851
    %v853 = vmul.f32 %v822, 1.442695
    %v854 = vpow.pop %v853
    %v855 = vmul.f32 %v828, 1.442695
    %v856 = vpow.pop %v855
    %v857 = vmul.f32 %v834, 1.442695
    %v858 = vpow.pop %v857
    %v859 = vmul.f32 %v840, 1.442695
    %v860 = vpow.pop %v859
    %v861 = vld [vmem:[%s2] sm:$0x1]
    %vm862 = vcmask 531456
    %v864 = vsel %vm862, %v861, 0
    %vm866 = vcmask 1040384
    %v868 = vsel %vm866, %v860, 0
    %870 = vmatprep.subr.mxu0 0.0
    %v871 = vand.u32 %v844, 4294901760
    %872 = vmatpush1.msra.mxu0 %v871
    %873 = vmatprep.subr.mxu0 0.0
    %v874 = vand.u32 %v846, 4294901760
    %875 = vmatpush1.msra.mxu0 %v874
    %876 = vmatprep.subr.mxu0 0.0
    %v877 = vand.u32 %v848, 4294901760
    %878 = vmatpush1.msra.mxu0 %v877
    %879 = vmatprep.subr.mxu0 0.0
    %v880 = vand.u32 %v850, 4294901760
    %881 = vmatpush1.msra.mxu0 %v880
    %882 = vmatprep.subr.mxu0 0.0
    %v883 = vand.u32 %v852, 4294901760
    %884 = vmatpush1.msra.mxu0 %v883
    %885 = vmatprep.subr.mxu0 0.0
    %v886 = vand.u32 %v854, 4294901760
    %887 = vmatpush1.msra.mxu0 %v886
    %888 = vmatprep.subr.mxu0 0.0
    %v889 = vand.u32 %v856, 4294901760
    %890 = vmatpush1.msra.mxu0 %v889
    %891 = vmatprep.subr.mxu0 0.0
    %v892 = vand.u32 %v858, 4294901760
    %893 = vmatpush1.msra.mxu0 %v892
    %894 = vmatprep.subr.mxu0 0.0
    %v895 = vand.u32 %v868, 4294901760
    %896 = vmatpush1.msra.mxu0 %v895
    %897 = vmatprep.subr.mxu0 0.0
    %898 = vmatpush1.msra.mxu0 0.0
    %899 = vmatprep.subr.mxu0 0.0
    %900 = vmatpush1.msra.mxu0 0.0
    %901 = vmatprep.subr.mxu0 0.0
    %902 = vmatpush1.msra.mxu0 0.0
    %903 = vmatprep.subr.mxu0 0.0
    %904 = vmatpush1.msra.mxu0 0.0
    %905 = vmatprep.subr.mxu0 0.0
    %906 = vmatpush1.msra.mxu0 0.0
    %907 = vmatprep.subr.mxu0 0.0
    %908 = vmatpush1.msra.mxu0 0.0
    %909 = vmatprep.subr.mxu0 0.0
    %910 = vmatpush1.msra.mxu0 0.0
    %911 = vmatprep.subr.mxu0 0.0
    %912 = vmatpush1.msra.mxu0 0.0
    %913 = vmatprep.subr.mxu0 0.0
    %914 = vmatpush1.msra.mxu0 0.0
    %915 = vmatprep.subr.mxu0 0.0
    %916 = vmatpush1.msra.mxu0 0.0
    %917 = vmatprep.subr.mxu0 0.0
    %918 = vmatpush1.msra.mxu0 0.0
    %919 = vmatprep.subr.mxu0 0.0
    %920 = vmatpush1.msra.mxu0 0.0
    %921 = vmatprep.subr.mxu0 0.0
    %922 = vmatpush1.msra.mxu0 0.0
    %923 = vmatprep.subr.mxu0 0.0
    %924 = vmatpush1.msra.mxu0 0.0
    %925 = vmatprep.subr.mxu0 0.0
    %926 = vmatpush1.msra.mxu0 0.0
    %927 = vmatprep.subr.mxu0 0.0
    %928 = vmatpush1.msra.mxu0 0.0
    %929 = vmatprep.subr.mxu0 0.0
    %930 = vmatpush1.msra.mxu0 0.0
    %931 = vmatprep.subr.mxu0 0.0
    %932 = vmatpush1.msra.mxu0 0.0
    %933 = vmatprep.subr.mxu0 0.0
    %934 = vmatpush1.msra.mxu0 0.0
    %935 = vmatprep.subr.mxu0 0.0
    %936 = vmatpush1.msra.mxu0 0.0
    %937 = vmatprep.subr.mxu0 0.0
    %938 = vmatpush1.msra.mxu0 0.0
    %939 = vmatprep.subr.mxu0 0.0
    %940 = vmatpush1.msra.mxu0 0.0
    %941 = vmatprep.subr.mxu0 0.0
    %942 = vmatpush1.msra.mxu0 0.0
    %943 = vmatprep.mubr.f32.mxu0 0.0
    %v944 = vand.u32 %v864, 4294901760
    %v945 = vsub.f32 %v864, %v944
    %v946 = vand.u32 %v945, 4294901760
    %v947 = vsub.f32 %v945, %v946
    %v948 = vand.u32 %v947, 4294901760
    %949 = vmatmul.mubr.f32.gmra.mrb[0].mxu0 %v948
    %v950 = vpop.f32.mrb[0].mxu0
    %v951 = vadd.f32 0.0, %v950
    %v952 = vpop.f32.mrb[0].mxu0
    %953 = vdwg.mxu0
    %954 = vmatprep.subr.mxu0 0.0
    %v955 = vand.u32 %v844, 4294901760
    %v956 = vsub.f32 %v844, %v955
    %v957 = vand.u32 %v956, 4294901760
    %v958 = vsub.f32 %v956, %v957
    %v959 = vand.u32 %v958, 4294901760
    %960 = vmatpush1.msra.mxu0 %v959
    %961 = vmatprep.subr.mxu0 0.0
    %v962 = vand.u32 %v846, 4294901760
    %v963 = vsub.f32 %v846, %v962
    %v964 = vand.u32 %v963, 4294901760
    %v965 = vsub.f32 %v963, %v964
    %v966 = vand.u32 %v965, 4294901760
    %967 = vmatpush1.msra.mxu0 %v966
    %968 = vmatprep.subr.mxu0 0.0
    %v969 = vand.u32 %v848, 4294901760
    %v970 = vsub.f32 %v848, %v969
    %v971 = vand.u32 %v970, 4294901760
    %v972 = vsub.f32 %v970, %v971
    %v973 = vand.u32 %v972, 4294901760
    %974 = vmatpush1.msra.mxu0 %v973
    %975 = vmatprep.subr.mxu0 0.0
    %v976 = vand.u32 %v850, 4294901760
    %v977 = vsub.f32 %v850, %v976
    %v978 = vand.u32 %v977, 4294901760
    %v979 = vsub.f32 %v977, %v978
    %v980 = vand.u32 %v979, 4294901760
    %981 = vmatpush1.msra.mxu0 %v980
    %982 = vmatprep.subr.mxu0 0.0
    %v983 = vand.u32 %v852, 4294901760
    %v984 = vsub.f32 %v852, %v983
    %v985 = vand.u32 %v984, 4294901760
    %v986 = vsub.f32 %v984, %v985
    %v987 = vand.u32 %v986, 4294901760
    %988 = vmatpush1.msra.mxu0 %v987
    %989 = vmatprep.subr.mxu0 0.0
    %v990 = vand.u32 %v854, 4294901760
    %v991 = vsub.f32 %v854, %v990
    %v992 = vand.u32 %v991, 4294901760
    %v993 = vsub.f32 %v991, %v992
    %v994 = vand.u32 %v993, 4294901760
    %995 = vmatpush1.msra.mxu0 %v994
    %996 = vmatprep.subr.mxu0 0.0
    %v997 = vand.u32 %v856, 4294901760
    %v998 = vsub.f32 %v856, %v997
    %v999 = vand.u32 %v998, 4294901760
    %v1000 = vsub.f32 %v998, %v999
    %v1001 = vand.u32 %v1000, 4294901760
    %1002 = vmatpush1.msra.mxu0 %v1001
    %1003 = vmatprep.subr.mxu0 0.0
    %v1004 = vand.u32 %v858, 4294901760
    %v1005 = vsub.f32 %v858, %v1004
    %v1006 = vand.u32 %v1005, 4294901760
    %v1007 = vsub.f32 %v1005, %v1006
    %v1008 = vand.u32 %v1007, 4294901760
    %1009 = vmatpush1.msra.mxu0 %v1008
    %1010 = vmatprep.subr.mxu0 0.0
    %v1011 = vand.u32 %v868, 4294901760
    %v1012 = vsub.f32 %v868, %v1011
    %v1013 = vand.u32 %v1012, 4294901760
    %v1014 = vsub.f32 %v1012, %v1013
    %v1015 = vand.u32 %v1014, 4294901760
    %1016 = vmatpush1.msra.mxu0 %v1015
    %1017 = vmatprep.subr.mxu0 0.0
    %1018 = vmatpush1.msra.mxu0 0.0
    %1019 = vmatprep.subr.mxu0 0.0
    %1020 = vmatpush1.msra.mxu0 0.0
    %1021 = vmatprep.subr.mxu0 0.0
    %1022 = vmatpush1.msra.mxu0 0.0
    %1023 = vmatprep.subr.mxu0 0.0
    %1024 = vmatpush1.msra.mxu0 0.0
    %1025 = vmatprep.subr.mxu0 0.0
    %1026 = vmatpush1.msra.mxu0 0.0
    %1027 = vmatprep.subr.mxu0 0.0
    %1028 = vmatpush1.msra.mxu0 0.0
    %1029 = vmatprep.subr.mxu0 0.0
    %1030 = vmatpush1.msra.mxu0 0.0
    %1031 = vmatprep.subr.mxu0 0.0
    %1032 = vmatpush1.msra.mxu0 0.0
    %1033 = vmatprep.subr.mxu0 0.0
    %1034 = vmatpush1.msra.mxu0 0.0
    %1035 = vmatprep.subr.mxu0 0.0
    %1036 = vmatpush1.msra.mxu0 0.0
    %1037 = vmatprep.subr.mxu0 0.0
    %1038 = vmatpush1.msra.mxu0 0.0
    %1039 = vmatprep.subr.mxu0 0.0
    %1040 = vmatpush1.msra.mxu0 0.0
    %1041 = vmatprep.subr.mxu0 0.0
    %1042 = vmatpush1.msra.mxu0 0.0
    %1043 = vmatprep.subr.mxu0 0.0
    %1044 = vmatpush1.msra.mxu0 0.0
    %1045 = vmatprep.subr.mxu0 0.0
    %1046 = vmatpush1.msra.mxu0 0.0
    %1047 = vmatprep.subr.mxu0 0.0
    %1048 = vmatpush1.msra.mxu0 0.0
    %1049 = vmatprep.subr.mxu0 0.0
    %1050 = vmatpush1.msra.mxu0 0.0
    %1051 = vmatprep.subr.mxu0 0.0
    %1052 = vmatpush1.msra.mxu0 0.0
    %1053 = vmatprep.subr.mxu0 0.0
    %1054 = vmatpush1.msra.mxu0 0.0
    %1055 = vmatprep.subr.mxu0 0.0
    %1056 = vmatpush1.msra.mxu0 0.0
    %1057 = vmatprep.subr.mxu0 0.0
    %1058 = vmatpush1.msra.mxu0 0.0
    %1059 = vmatprep.subr.mxu0 0.0
    %1060 = vmatpush1.msra.mxu0 0.0
    %1061 = vmatprep.subr.mxu0 0.0
    %1062 = vmatpush1.msra.mxu0 0.0
    %1063 = vmatprep.mubr.f32.mxu0 0.0
    %v1064 = vand.u32 %v864, 4294901760
    %1065 = vmatmul.mubr.f32.gmra.mrb[0].mxu0 %v1064
    %v1066 = vpop.f32.mrb[0].mxu0
    %v1067 = vadd.f32 %v951, %v1066
    %v1068 = vpop.f32.mrb[0].mxu0
    %1069 = vdwg.mxu0
    %1070 = vmatprep.subr.mxu0 0.0
    %v1071 = vand.u32 %v844, 4294901760
    %v1072 = vsub.f32 %v844, %v1071
    %1073 = vmatpush1.msra.mxu0 %v1072
    %1074 = vmatprep.subr.mxu0 0.0
    %v1075 = vand.u32 %v846, 4294901760
    %v1076 = vsub.f32 %v846, %v1075
    %1077 = vmatpush1.msra.mxu0 %v1076
    %1078 = vmatprep.subr.mxu0 0.0
    %v1079 = vand.u32 %v848, 4294901760
    %v1080 = vsub.f32 %v848, %v1079
    %1081 = vmatpush1.msra.mxu0 %v1080
    %1082 = vmatprep.subr.mxu0 0.0
    %v1083 = vand.u32 %v850, 4294901760
    %v1084 = vsub.f32 %v850, %v1083
    %1085 = vmatpush1.msra.mxu0 %v1084
    %1086 = vmatprep.subr.mxu0 0.0
    %v1087 = vand.u32 %v852, 4294901760
    %v1088 = vsub.f32 %v852, %v1087
    %1089 = vmatpush1.msra.mxu0 %v1088
    %1090 = vmatprep.subr.mxu0 0.0
    %v1091 = vand.u32 %v854, 4294901760
    %v1092 = vsub.f32 %v854, %v1091
    %1093 = vmatpush1.msra.mxu0 %v1092
    %1094 = vmatprep.subr.mxu0 0.0
    %v1095 = vand.u32 %v856, 4294901760
    %v1096 = vsub.f32 %v856, %v1095
    %1097 = vmatpush1.msra.mxu0 %v1096
    %1098 = vmatprep.subr.mxu0 0.0
    %v1099 = vand.u32 %v858, 4294901760
    %v1100 = vsub.f32 %v858, %v1099
    %1101 = vmatpush1.msra.mxu0 %v1100
    %1102 = vmatprep.subr.mxu0 0.0
    %v1103 = vand.u32 %v868, 4294901760
    %v1104 = vsub.f32 %v868, %v1103
    %1105 = vmatpush1.msra.mxu0 %v1104
    %1106 = vmatprep.subr.mxu0 0.0
    %1107 = vmatpush1.msra.mxu0 0.0
    %1108 = vmatprep.subr.mxu0 0.0
    %1109 = vmatpush1.msra.mxu0 0.0
    %1110 = vmatprep.subr.mxu0 0.0
    %1111 = vmatpush1.msra.mxu0 0.0
    %1112 = vmatprep.subr.mxu0 0.0
    %1113 = vmatpush1.msra.mxu0 0.0
    %1114 = vmatprep.subr.mxu0 0.0
    %1115 = vmatpush1.msra.mxu0 0.0
    %1116 = vmatprep.subr.mxu0 0.0
    %1117 = vmatpush1.msra.mxu0 0.0
    %1118 = vmatprep.subr.mxu0 0.0
    %1119 = vmatpush1.msra.mxu0 0.0
    %1120 = vmatprep.subr.mxu0 0.0
    %1121 = vmatpush1.msra.mxu0 0.0
    %1122 = vmatprep.subr.mxu0 0.0
    %1123 = vmatpush1.msra.mxu0 0.0
    %1124 = vmatprep.subr.mxu0 0.0
    %1125 = vmatpush1.msra.mxu0 0.0
    %1126 = vmatprep.subr.mxu0 0.0
    %1127 = vmatpush1.msra.mxu0 0.0
    %1128 = vmatprep.subr.mxu0 0.0
    %1129 = vmatpush1.msra.mxu0 0.0
    %1130 = vmatprep.subr.mxu0 0.0
    %1131 = vmatpush1.msra.mxu0 0.0
    %1132 = vmatprep.subr.mxu0 0.0
    %1133 = vmatpush1.msra.mxu0 0.0
    %1134 = vmatprep.subr.mxu0 0.0
    %1135 = vmatpush1.msra.mxu0 0.0
    %1136 = vmatprep.subr.mxu0 0.0
    %1137 = vmatpush1.msra.mxu0 0.0
    %1138 = vmatprep.subr.mxu0 0.0
    %1139 = vmatpush1.msra.mxu0 0.0
    %1140 = vmatprep.subr.mxu0 0.0
    %1141 = vmatpush1.msra.mxu0 0.0
    %1142 = vmatprep.subr.mxu0 0.0
    %1143 = vmatpush1.msra.mxu0 0.0
    %1144 = vmatprep.subr.mxu0 0.0
    %1145 = vmatpush1.msra.mxu0 0.0
    %1146 = vmatprep.subr.mxu0 0.0
    %1147 = vmatpush1.msra.mxu0 0.0
    %1148 = vmatprep.subr.mxu0 0.0
    %1149 = vmatpush1.msra.mxu0 0.0
    %1150 = vmatprep.subr.mxu0 0.0
    %1151 = vmatpush1.msra.mxu0 0.0
    %1152 = vmatprep.mubr.f32.mxu0 0.0
    %v1153 = vand.u32 %v864, 4294901760
    %v1154 = vsub.f32 %v864, %v1153
    %1155 = vmatmul.mubr.f32.gmra.mrb[0].mxu0 %v1154
    %v1156 = vpop.f32.mrb[0].mxu0
    %v1157 = vadd.f32 %v1067, %v1156
    %v1158 = vpop.f32.mrb[0].mxu0
    %1159 = vdwg.mxu0
    %1160 = vmatprep.subr.mxu0 0.0
    %v1161 = vand.u32 %v844, 4294901760
    %1162 = vmatpush1.msra.mxu0 %v1161
    %1163 = vmatprep.subr.mxu0 0.0
    %v1164 = vand.u32 %v846, 4294901760
    %1165 = vmatpush1.msra.mxu0 %v1164
    %1166 = vmatprep.subr.mxu0 0.0
    %v1167 = vand.u32 %v848, 4294901760
    %1168 = vmatpush1.msra.mxu0 %v1167
    %1169 = vmatprep.subr.mxu0 0.0
    %v1170 = vand.u32 %v850, 4294901760
    %1171 = vmatpush1.msra.mxu0 %v1170
    %1172 = vmatprep.subr.mxu0 0.0
    %v1173 = vand.u32 %v852, 4294901760
    %1174 = vmatpush1.msra.mxu0 %v1173
    %1175 = vmatprep.subr.mxu0 0.0
    %v1176 = vand.u32 %v854, 4294901760
    %1177 = vmatpush1.msra.mxu0 %v1176
    %1178 = vmatprep.subr.mxu0 0.0
    %v1179 = vand.u32 %v856, 4294901760
    %1180 = vmatpush1.msra.mxu0 %v1179
    %1181 = vmatprep.subr.mxu0 0.0
    %v1182 = vand.u32 %v858, 4294901760
    %1183 = vmatpush1.msra.mxu0 %v1182
    %1184 = vmatprep.subr.mxu0 0.0
    %v1185 = vand.u32 %v868, 4294901760
    %1186 = vmatpush1.msra.mxu0 %v1185
    %1187 = vmatprep.subr.mxu0 0.0
    %1188 = vmatpush1.msra.mxu0 0.0
    %1189 = vmatprep.subr.mxu0 0.0
    %1190 = vmatpush1.msra.mxu0 0.0
    %1191 = vmatprep.subr.mxu0 0.0
    %1192 = vmatpush1.msra.mxu0 0.0
    %1193 = vmatprep.subr.mxu0 0.0
    %1194 = vmatpush1.msra.mxu0 0.0
    %1195 = vmatprep.subr.mxu0 0.0
    %1196 = vmatpush1.msra.mxu0 0.0
    %1197 = vmatprep.subr.mxu0 0.0
    %1198 = vmatpush1.msra.mxu0 0.0
    %1199 = vmatprep.subr.mxu0 0.0
    %1200 = vmatpush1.msra.mxu0 0.0
    %1201 = vmatprep.subr.mxu0 0.0
    %1202 = vmatpush1.msra.mxu0 0.0
    %1203 = vmatprep.subr.mxu0 0.0
    %1204 = vmatpush1.msra.mxu0 0.0
    %1205 = vmatprep.subr.mxu0 0.0
    %1206 = vmatpush1.msra.mxu0 0.0
    %1207 = vmatprep.subr.mxu0 0.0
    %1208 = vmatpush1.msra.mxu0 0.0
    %1209 = vmatprep.subr.mxu0 0.0
    %1210 = vmatpush1.msra.mxu0 0.0
    %1211 = vmatprep.subr.mxu0 0.0
    %1212 = vmatpush1.msra.mxu0 0.0
    %1213 = vmatprep.subr.mxu0 0.0
    %1214 = vmatpush1.msra.mxu0 0.0
    %1215 = vmatprep.subr.mxu0 0.0
    %1216 = vmatpush1.msra.mxu0 0.0
    %1217 = vmatprep.subr.mxu0 0.0
    %1218 = vmatpush1.msra.mxu0 0.0
    %1219 = vmatprep.subr.mxu0 0.0
    %1220 = vmatpush1.msra.mxu0 0.0
    %1221 = vmatprep.subr.mxu0 0.0
    %1222 = vmatpush1.msra.mxu0 0.0
    %1223 = vmatprep.subr.mxu0 0.0
    %1224 = vmatpush1.msra.mxu0 0.0
    %1225 = vmatprep.subr.mxu0 0.0
    %1226 = vmatpush1.msra.mxu0 0.0
    %1227 = vmatprep.subr.mxu0 0.0
    %1228 = vmatpush1.msra.mxu0 0.0
    %1229 = vmatprep.subr.mxu0 0.0
    %1230 = vmatpush1.msra.mxu0 0.0
    %1231 = vmatprep.subr.mxu0 0.0
    %1232 = vmatpush1.msra.mxu0 0.0
    %1233 = vmatprep.mubr.f32.mxu0 0.0
    %v1234 = vand.u32 %v864, 4294901760
    %v1235 = vsub.f32 %v864, %v1234
    %v1236 = vand.u32 %v1235, 4294901760
    %1237 = vmatmul.mubr.f32.gmra.mrb[0].mxu0 %v1236
    %v1238 = vpop.f32.mrb[0].mxu0
    %v1239 = vadd.f32 %v1157, %v1238
    %v1240 = vpop.f32.mrb[0].mxu0
    %1241 = vdwg.mxu0
    %1242 = vmatprep.subr.mxu0 0.0
    %v1243 = vand.u32 %v844, 4294901760
    %v1244 = vsub.f32 %v844, %v1243
    %v1245 = vand.u32 %v1244, 4294901760
    %1246 = vmatpush1.msra.mxu0 %v1245
    %1247 = vmatprep.subr.mxu0 0.0
    %v1248 = vand.u32 %v846, 4294901760
    %v1249 = vsub.f32 %v846, %v1248
    %v1250 = vand.u32 %v1249, 4294901760
    %1251 = vmatpush1.msra.mxu0 %v1250
    %1252 = vmatprep.subr.mxu0 0.0
    %v1253 = vand.u32 %v848, 4294901760
    %v1254 = vsub.f32 %v848, %v1253
    %v1255 = vand.u32 %v1254, 4294901760
    %1256 = vmatpush1.msra.mxu0 %v1255
    %1257 = vmatprep.subr.mxu0 0.0
    %v1258 = vand.u32 %v850, 4294901760
    %v1259 = vsub.f32 %v850, %v1258
    %v1260 = vand.u32 %v1259, 4294901760
    %1261 = vmatpush1.msra.mxu0 %v1260
    %1262 = vmatprep.subr.mxu0 0.0
    %v1263 = vand.u32 %v852, 4294901760
    %v1264 = vsub.f32 %v852, %v1263
    %v1265 = vand.u32 %v1264, 4294901760
    %1266 = vmatpush1.msra.mxu0 %v1265
    %1267 = vmatprep.subr.mxu0 0.0
    %v1268 = vand.u32 %v854, 4294901760
    %v1269 = vsub.f32 %v854, %v1268
    %v1270 = vand.u32 %v1269, 4294901760
    %1271 = vmatpush1.msra.mxu0 %v1270
    %1272 = vmatprep.subr.mxu0 0.0
    %v1273 = vand.u32 %v856, 4294901760
    %v1274 = vsub.f32 %v856, %v1273
    %v1275 = vand.u32 %v1274, 4294901760
    %1276 = vmatpush1.msra.mxu0 %v1275
    %1277 = vmatprep.subr.mxu0 0.0
    %v1278 = vand.u32 %v858, 4294901760
    %v1279 = vsub.f32 %v858, %v1278
    %v1280 = vand.u32 %v1279, 4294901760
    %1281 = vmatpush1.msra.mxu0 %v1280
    %1282 = vmatprep.subr.mxu0 0.0
    %v1283 = vand.u32 %v868, 4294901760
    %v1284 = vsub.f32 %v868, %v1283
    %v1285 = vand.u32 %v1284, 4294901760
    %1286 = vmatpush1.msra.mxu0 %v1285
    %1287 = vmatprep.subr.mxu0 0.0
    %1288 = vmatpush1.msra.mxu0 0.0
    %1289 = vmatprep.subr.mxu0 0.0
    %1290 = vmatpush1.msra.mxu0 0.0
    %1291 = vmatprep.subr.mxu0 0.0
    %1292 = vmatpush1.msra.mxu0 0.0
    %1293 = vmatprep.subr.mxu0 0.0
    %1294 = vmatpush1.msra.mxu0 0.0
    %1295 = vmatprep.subr.mxu0 0.0
    %1296 = vmatpush1.msra.mxu0 0.0
    %1297 = vmatprep.subr.mxu0 0.0
    %1298 = vmatpush1.msra.mxu0 0.0
    %1299 = vmatprep.subr.mxu0 0.0
    %1300 = vmatpush1.msra.mxu0 0.0
    %1301 = vmatprep.subr.mxu0 0.0
    %1302 = vmatpush1.msra.mxu0 0.0
    %1303 = vmatprep.subr.mxu0 0.0
    %1304 = vmatpush1.msra.mxu0 0.0
    %1305 = vmatprep.subr.mxu0 0.0
    %1306 = vmatpush1.msra.mxu0 0.0
    %1307 = vmatprep.subr.mxu0 0.0
    %1308 = vmatpush1.msra.mxu0 0.0
    %1309 = vmatprep.subr.mxu0 0.0
    %1310 = vmatpush1.msra.mxu0 0.0
    %1311 = vmatprep.subr.mxu0 0.0
    %1312 = vmatpush1.msra.mxu0 0.0
    %1313 = vmatprep.subr.mxu0 0.0
    %1314 = vmatpush1.msra.mxu0 0.0
    %1315 = vmatprep.subr.mxu0 0.0
    %1316 = vmatpush1.msra.mxu0 0.0
    %1317 = vmatprep.subr.mxu0 0.0
    %1318 = vmatpush1.msra.mxu0 0.0
    %1319 = vmatprep.subr.mxu0 0.0
    %1320 = vmatpush1.msra.mxu0 0.0
    %1321 = vmatprep.subr.mxu0 0.0
    %1322 = vmatpush1.msra.mxu0 0.0
    %1323 = vmatprep.subr.mxu0 0.0
    %1324 = vmatpush1.msra.mxu0 0.0
    %1325 = vmatprep.subr.mxu0 0.0
    %1326 = vmatpush1.msra.mxu0 0.0
    %1327 = vmatprep.subr.mxu0 0.0
    %1328 = vmatpush1.msra.mxu0 0.0
    %1329 = vmatprep.subr.mxu0 0.0
    %1330 = vmatpush1.msra.mxu0 0.0
    %1331 = vmatprep.subr.mxu0 0.0
    %1332 = vmatpush1.msra.mxu0 0.0
    %1333 = vmatprep.mubr.f32.mxu0 0.0
    %v1334 = vand.u32 %v864, 4294901760
    %1335 = vmatmul.mubr.f32.gmra.mrb[0].mxu0 %v1334
    %v1336 = vpop.f32.mrb[0].mxu0
    %v1337 = vadd.f32 %v1239, %v1336
    %v1338 = vpop.f32.mrb[0].mxu0
    %1339 = vdwg.mxu0
    %1340 = vmatprep.subr.mxu0 0.0
    %v1341 = vand.u32 %v844, 4294901760
    %1342 = vmatpush1.msra.mxu0 %v1341
    %1343 = vmatprep.subr.mxu0 0.0
    %v1344 = vand.u32 %v846, 4294901760
    %1345 = vmatpush1.msra.mxu0 %v1344
    %1346 = vmatprep.subr.mxu0 0.0
    %v1347 = vand.u32 %v848, 4294901760
    %1348 = vmatpush1.msra.mxu0 %v1347
    %1349 = vmatprep.subr.mxu0 0.0
    %v1350 = vand.u32 %v850, 4294901760
    %1351 = vmatpush1.msra.mxu0 %v1350
    %1352 = vmatprep.subr.mxu0 0.0
    %v1353 = vand.u32 %v852, 4294901760
    %1354 = vmatpush1.msra.mxu0 %v1353
    %1355 = vmatprep.subr.mxu0 0.0
    %v1356 = vand.u32 %v854, 4294901760
    %1357 = vmatpush1.msra.mxu0 %v1356
    %1358 = vmatprep.subr.mxu0 0.0
    %v1359 = vand.u32 %v856, 4294901760
    %1360 = vmatpush1.msra.mxu0 %v1359
    %1361 = vmatprep.subr.mxu0 0.0
    %v1362 = vand.u32 %v858, 4294901760
    %1363 = vmatpush1.msra.mxu0 %v1362
    %1364 = vmatprep.subr.mxu0 0.0
    %v1365 = vand.u32 %v868, 4294901760
    %1366 = vmatpush1.msra.mxu0 %v1365
    %1367 = vmatprep.subr.mxu0 0.0
    %1368 = vmatpush1.msra.mxu0 0.0
    %1369 = vmatprep.subr.mxu0 0.0
    %1370 = vmatpush1.msra.mxu0 0.0
    %1371 = vmatprep.subr.mxu0 0.0
    %1372 = vmatpush1.msra.mxu0 0.0
    %1373 = vmatprep.subr.mxu0 0.0
    %1374 = vmatpush1.msra.mxu0 0.0
    %1375 = vmatprep.subr.mxu0 0.0
    %1376 = vmatpush1.msra.mxu0 0.0
    %1377 = vmatprep.subr.mxu0 0.0
    %1378 = vmatpush1.msra.mxu0 0.0
    %1379 = vmatprep.subr.mxu0 0.0
    %1380 = vmatpush1.msra.mxu0 0.0
    %1381 = vmatprep.subr.mxu0 0.0
    %1382 = vmatpush1.msra.mxu0 0.0
    %1383 = vmatprep.subr.mxu0 0.0
    %1384 = vmatpush1.msra.mxu0 0.0
    %1385 = vmatprep.subr.mxu0 0.0
    %1386 = vmatpush1.msra.mxu0 0.0
    %1387 = vmatprep.subr.mxu0 0.0
    %1388 = vmatpush1.msra.mxu0 0.0
    %1389 = vmatprep.subr.mxu0 0.0
    %1390 = vmatpush1.msra.mxu0 0.0
    %1391 = vmatprep.subr.mxu0 0.0
    %1392 = vmatpush1.msra.mxu0 0.0
    %1393 = vmatprep.subr.mxu0 0.0
    %1394 = vmatpush1.msra.mxu0 0.0
    %1395 = vmatprep.subr.mxu0 0.0
    %1396 = vmatpush1.msra.mxu0 0.0
    %1397 = vmatprep.subr.mxu0 0.0
    %1398 = vmatpush1.msra.mxu0 0.0
    %1399 = vmatprep.subr.mxu0 0.0
    %1400 = vmatpush1.msra.mxu0 0.0
    %1401 = vmatprep.subr.mxu0 0.0
    %1402 = vmatpush1.msra.mxu0 0.0
    %1403 = vmatprep.subr.mxu0 0.0
    %1404 = vmatpush1.msra.mxu0 0.0
    %1405 = vmatprep.subr.mxu0 0.0
    %1406 = vmatpush1.msra.mxu0 0.0
    %1407 = vmatprep.subr.mxu0 0.0
    %1408 = vmatpush1.msra.mxu0 0.0
    %1409 = vmatprep.subr.mxu0 0.0
    %1410 = vmatpush1.msra.mxu0 0.0
    %1411 = vmatprep.subr.mxu0 0.0
    %1412 = vmatpush1.msra.mxu0 0.0
    %1413 = vmatprep.mubr.f32.mxu0 0.0
    %v1414 = vand.u32 %v864, 4294901760
    %1415 = vmatmul.mubr.f32.gmra.mrb[0].mxu0 %v1414
    %v1416 = vpop.f32.mrb[0].mxu0
    %v1417 = vadd.f32 %v1337, %v1416
    %v1418 = vpop.f32.mrb[0].mxu0
    %1419 = vdwg.mxu0
    %v1420 = vlog2.pop %v1417
    %v1421 = vmul.f32 %v1420, 0.6931472
    %vm1422 = vcmask 122880
    %1423 = vst.msk [vmem:[#allocation2] sm:$0x1] %vm1422, %v1421
    %v1424 = vmul.f32 %v1421, 0.5
    %v1425 = vsub.f32 %v15, %v1424
    %1426 = vst.msk [vmem:[#allocation2 + $0x1] sm:$0x1] %vm1422, %v1425
    %vm1427 = vcmask 130049
    %1428 = vst.msk [vmem:[#allocation2 + $0x1] sm:$0xfe] %vm1427, %v15
    // Predicated region
    $region14: #{tpu_custom_call.1} parent=1 // pred_check
      _
    $region15: #{tpu_custom_call.1} parent=1 // pred_check_branch
      %1430 = sbr.rel (0) target = $region17
    $region16: #{tpu_custom_call.1} parent=1 // pred_region
      %s1432 = ssub.s32 256, 256
      %1433 = vsyncadd [#allocation3], %s1432
      %s1434 = sshll.u32 [#allocation2], 4
      %s1435 = int_to_ptr.vmem [resolvable:$true] %s1434
      %1440 = dma.vmem_to_hbm [thread:$0]  %s1435, 256, %s3, [#allocation3], 128, 128, 8
    $region17: #{tpu_custom_call.1} parent=1 // pred_fallthru
      _
    // Predicated region
    $region18: #{tpu_custom_call.1} parent=1 // pred_check
      _
    $region19: #{tpu_custom_call.1} parent=1 // pred_check_branch
      %1442 = sbr.rel (0) target = $region21
    $region20: #{tpu_custom_call.1} parent=1 // pred_region
      %1443 = dma.done [#allocation3], 256
    $region21: #{tpu_custom_call.1} parent=1 // pred_fallthru
      _
    %1444 = vsyncpa [#allocation3], 1

</llo_original>
